<compile_context>
chip_gen: v6e
topology: v6e:2x2x1
jax: 0.10.0
libtpu: 0.0.40
codegen_flags: <defaults>
</compile_context>

<pallas_src>
import functools

import jax
import jax.numpy as jnp
from jax import lax
from jax.experimental import pallas as pl
from jax.experimental.pallas import tpu as pltpu

BN_EPS = 1e-5


def _conv_bn_kernel(x_ref, w_ref, gamma_ref, beta_ref, o_ref,
                    sum_ref, sumsq_ref, scale_ref, shift_ref, *, inv_m, nb):
    # x_ref:     (NB, Cin, THW)  bf16  -- activation tile, NCHW-flattened, HW on lanes
    # w_ref:     (Cout, Cin)     bf16  -- 1x1 conv weight, resident
    # gamma_ref: (Cout, 1)       f32   -- resident
    # beta_ref:  (Cout, 1)       f32   -- resident
    # o_ref:     (NB, Cout, THW) out dtype (bf16 by default)
    # scratch:   sum/sumsq/scale/shift all (Cout, 1) f32, persistent across the grid
    p = pl.program_id(0)            # pass: 0 = accumulate stats, 1 = normalize + store
    i = pl.program_id(1)            # batch block
    j = pl.program_id(2)            # HW tile
    first_tile = jnp.logical_and(i == 0, j == 0)

    @pl.when(jnp.logical_and(p == 0, first_tile))
    def _init():
        sum_ref[...] = jnp.zeros_like(sum_ref)
        sumsq_ref[...] = jnp.zeros_like(sumsq_ref)

    @pl.when(jnp.logical_and(p == 1, first_tile))
    def _finalize_stats():
        mean = sum_ref[...] * inv_m
        var = sumsq_ref[...] * inv_m - mean * mean          # biased variance
        # TODO(synk): E[y^2]-E[y]^2 in f32 is cancellation-prone when |mean| >> std at
        # very large M; fine at CIFAR scale (a per-tile-centered scheme is safer beyond).
        scale = gamma_ref[...] * lax.rsqrt(var + BN_EPS)
        scale_ref[...] = scale
        shift_ref[...] = beta_ref[...] - mean * scale

    w = w_ref[...]

    @pl.when(p == 0)
    def _accumulate_stats():
        @pl.loop(0, nb)
        def _(b):
            # 1x1 conv == per-sample channel matmul on the MXU; bf16 in, f32 accumulate.
            y = jnp.dot(w, x_ref[b], preferred_element_type=jnp.float32)   # (Cout, THW)
            sum_ref[...] += jnp.sum(y, axis=1, keepdims=True)
            sumsq_ref[...] += jnp.sum(y * y, axis=1, keepdims=True)

    @pl.when(p == 1)
    def _normalize():
        scale = scale_ref[...]
        shift = shift_ref[...]

        @pl.loop(0, nb)
        def _(b):
            y = jnp.dot(w, x_ref[b], preferred_element_type=jnp.float32)   # (Cout, THW)
            o_ref[b] = (y * scale + shift).astype(o_ref.dtype)


def _round_up(x, m):
    return ((x + m - 1) // m) * m


def _vmem_budget_bytes():
    """Generation-aware scoped-VMEM budget.

    v5e/v6e: 128 MiB physical per TensorCore -> ~96 MiB budget;
    v7x:      64 MiB physical                -> ~48 MiB budget (leave headroom).
    """
    try:
        cap = int(pltpu.get_tpu_info().vmem_capacity_bytes)
    except Exception:
        cap = 64 * 1024 * 1024                      # conservative (v7x-sized) fallback
    return min((cap * 3) // 4, 96 * 1024 * 1024)


def _choose_tiles(n, cin, cout, hwp, budget_bytes, in_itemsize, out_itemsize):
    """Largest (NB, THW) block (NB | n, THW | hwp, THW % 128 == 0) whose double-buffered
    input + output tiles fit the VMEM budget.  At CIFAR scale this is the whole problem
    -> grid (2, 1, 1)."""
    def footprint(nb, thw):
        # BlockSpec double-buffers each streamed operand; resident W/gamma/beta and the
        # (Cout,1) scratch are negligible.
        return 2 * nb * thw * (cin * in_itemsize + cout * out_itemsize)

    nb_opts = [d for d in range(n, 0, -1) if n % d == 0]
    hw_opts = [d for d in range(hwp, 0, -128) if hwp % d == 0]
    best = None
    for nb in nb_opts:
        for thw in hw_opts:
            if footprint(nb, thw) <= budget_bytes:
                if best is None or nb * thw > best[0] * best[1]:
                    best = (nb, thw)
    return best if best is not None else (1, 128)


def downsample_conv(x_nchw, weight, gamma, beta, *,
                    compute_dtype=jnp.bfloat16, out_dtype=None):
    """Forward of DownsampleConv (1x1 stride-2 conv, no bias) + BatchNorm2d (batch stats).

    x_nchw : (N, Cin, H, W)    float32
    weight : (Cout, Cin, 1, 1) float32  (PyTorch Conv2d weight layout)
    gamma  : (Cout,)           float32
    beta   : (Cout,)           float32
    returns: (N, Cout, ceil(H/2), ceil(W/2)) in `out_dtype` (default bf16: the next
             ResNet layer consumes bf16 activations anyway; halves the HBM write stream).
    """
    if out_dtype is None:
        out_dtype = compute_dtype
    N, Cin, H, W = x_nchw.shape
    Cout = weight.shape[0]
    Hout, Wout = (H + 1) // 2, (W + 1) // 2
    HW = Hout * Wout
    M = N * HW                                        # true #columns for BN statistics
    HWp = _round_up(HW, 128)

    # --- wrapper glue (plain JAX) --------------------------------------------------
    # Stride-2 spatial subsample + flatten + bf16 cast + lane pad.  No transposes: the
    # kernel consumes / produces the NCHW-flattened (N, C, HW) layout directly, so XLA
    # fuses this chain into a single copy at bf16 width.
    # TODO(synk): the stride-2 gather itself could be folded into the kernel via a
    # strided DMA to remove this last wrapper pass.
    x_sub = x_nchw[:, :, ::2, ::2].reshape(N, Cin, HW).astype(compute_dtype)
    if HWp > HW:
        # Zero columns contribute 0 to sum/sumsq; stats use the true 1/M -> exact.
        x_sub = jnp.pad(x_sub, ((0, 0), (0, 0), (0, HWp - HW)))

    in_itemsize = jnp.dtype(compute_dtype).itemsize
    out_itemsize = jnp.dtype(out_dtype).itemsize
    vmem_limit = _vmem_budget_bytes()
    NB, THW = _choose_tiles(N, Cin, Cout, HWp, vmem_limit - (4 << 20),
                            in_itemsize, out_itemsize)
    n_nb, n_hw = N // NB, HWp // THW

    w_mat = weight.reshape(Cout, Cin).astype(compute_dtype)       # (Cout, Cin)
    gamma2 = gamma.reshape(Cout, 1).astype(jnp.float32)
    beta2 = beta.reshape(Cout, 1).astype(jnp.float32)

    kernel = functools.partial(_conv_bn_kernel, inv_m=float(1.0 / M), nb=NB)

    cost = pl.CostEstimate(
        flops=2 * 2 * Cout * Cin * N * HWp,                          # matmul, two passes
        transcendentals=Cout,                                        # rsqrt
        bytes_accessed=(2 * N * Cin * HWp * in_itemsize              # x streamed twice
                        + N * Cout * HWp * out_itemsize              # output
                        + Cout * Cin * in_itemsize + 2 * Cout * 4),  # params
    )

    out = pl.pallas_call(
        kernel,
        out_shape=jax.ShapeDtypeStruct((N, Cout, HWp), out_dtype),
        grid_spec=pltpu.PrefetchScalarGridSpec(
            num_scalar_prefetch=0,
            grid=(2, n_nb, n_hw),                                    # (pass, N block, HW tile)
            in_specs=[
                pl.BlockSpec((NB, Cin, THW), lambda p, i, j: (i, 0, j)),   # x (re-streamed pass 1)
                pl.BlockSpec((Cout, Cin), lambda p, i, j: (0, 0)),         # weights, resident
                pl.BlockSpec((Cout, 1), lambda p, i, j: (0, 0)),           # gamma, resident
                pl.BlockSpec((Cout, 1), lambda p, i, j: (0, 0)),           # beta, resident
            ],
            # During pass 0 the output block index stays (0,0,0) -> block held resident,
            # no garbage writebacks; pass 1 walks and stores every tile exactly once.
            # NOTE: relies on sequential ("arbitrary") grid axes -- do not mark any axis
            # "parallel" without restructuring.
            out_specs=pl.BlockSpec((NB, Cout, THW),
                                   lambda p, i, j: (i * p, 0, j * p)),
            scratch_shapes=[
                pltpu.VMEM((Cout, 1), jnp.float32),   # sum
                pltpu.VMEM((Cout, 1), jnp.float32),   # sum of squares
                pltpu.VMEM((Cout, 1), jnp.float32),   # folded scale
                pltpu.VMEM((Cout, 1), jnp.float32),   # folded shift
            ],
        ),
        compiler_params=pltpu.CompilerParams(
            # All grid axes carry the cross-tile BN accumulator -> sequential.
            dimension_semantics=("arbitrary", "arbitrary", "arbitrary"),
            vmem_limit_bytes=vmem_limit,
        ),
        cost_estimate=cost,
    )(x_sub, w_mat, gamma2, beta2)

    if HWp > HW:
        out = out[:, :, :HW]           # padded columns hold `shift`; never expose them
    return out.reshape(N, Cout, Hout, Wout)


if __name__ == "__main__":
    key = jax.random.PRNGKey(0)
    k_x, k_w = jax.random.split(key)

    N, Cin, H, W = 2, 4, 16, 16
    Cout = 8  # planes

    x = jax.random.normal(k_x, (N, Cin, H, W), dtype=jnp.float32)
    # Deterministic conv weight (PyTorch shape: (Cout, Cin, 1, 1)), no bias.
    weight = jax.random.normal(k_w, (Cout, Cin, 1, 1), dtype=jnp.float32) * 0.1
    # BatchNorm2d default init: gamma=1, beta=0.
    gamma = jnp.ones((Cout,), dtype=jnp.float32)
    beta = jnp.zeros((Cout,), dtype=jnp.float32)

    # Pure-JAX f32 reference (1x1 stride-2 conv + training-mode BatchNorm2d).
    x_sub = x[:, :, ::2, ::2]
    y_ref = jnp.einsum("oi,nihw->nohw", weight.reshape(Cout, Cin), x_sub)
    mean = y_ref.mean(axis=(0, 2, 3), keepdims=True)
    var = y_ref.var(axis=(0, 2, 3), keepdims=True)        # biased variance
    ref = (y_ref - mean) * jax.lax.rsqrt(var + BN_EPS)
    ref = ref * gamma.reshape(1, Cout, 1, 1) + beta.reshape(1, Cout, 1, 1)

    # f32-output path (strict tolerance: only the bf16 matmul inputs differ from ref).
    out_f32 = downsample_conv(x, weight, gamma, beta, out_dtype=jnp.float32)
    jax.block_until_ready(out_f32)
    assert out_f32.shape == (N, Cout, H // 2, W // 2), out_f32.shape
    err_f32 = float(jnp.max(jnp.abs(out_f32 - ref)))
    assert err_f32 < 5e-2, f"f32-out max abs error vs reference too large: {err_f32}"

    # Default bf16-output path (adds ~2^-9 relative quantization on the store).
    out_bf16 = downsample_conv(x, weight, gamma, beta)
    jax.block_until_ready(out_bf16)
    assert out_bf16.shape == (N, Cout, H // 2, W // 2), out_bf16.shape
    assert out_bf16.dtype == jnp.bfloat16, out_bf16.dtype
    err_bf16 = float(jnp.max(jnp.abs(out_bf16.astype(jnp.float32) - ref)))
    assert err_bf16 < 1e-1, f"bf16-out max abs error vs reference too large: {err_bf16}"

    print("KERNEL_OK")
</pallas_src>

<mosaic_0001>
module attributes {stable_mosaic.version = 11 : i64} {
  func.func @_conv_bn_kernel(%arg0: i32, %arg1: i32, %arg2: i32, %arg3: memref<2x4x128xbf16, #tpu.memory_space<vmem>>, %arg4: memref<8x4xbf16, #tpu.memory_space<vmem>>, %arg5: memref<8x1xf32, #tpu.memory_space<vmem>>, %arg6: memref<8x1xf32, #tpu.memory_space<vmem>>, %arg7: memref<2x8x128xf32, #tpu.memory_space<vmem>>, %arg8: memref<8x1xf32, #tpu.memory_space<vmem>>, %arg9: memref<8x1xf32, #tpu.memory_space<vmem>>, %arg10: memref<8x1xf32, #tpu.memory_space<vmem>>, %arg11: memref<8x1xf32, #tpu.memory_space<vmem>>) attributes {dimension_semantics = [#tpu.dimension_semantics<arbitrary>, #tpu.dimension_semantics<arbitrary>, #tpu.dimension_semantics<arbitrary>], iteration_bounds = array<i64: 2, 1, 1>, scalar_prefetch = 0 : i64, scratch_operands = 4 : i64, tpu.core_type = #tpu.core_type<tc>, window_params = [{transform_indices = @transform_0, window_bounds = array<i64: 2, 4, 128>}, {pipeline_mode = #tpu.pipeline_mode<synchronous>, transform_indices = @transform_1, window_bounds = array<i64: 8, 4>}, {pipeline_mode = #tpu.pipeline_mode<synchronous>, transform_indices = @transform_2, window_bounds = array<i64: 8, 1>}, {pipeline_mode = #tpu.pipeline_mode<synchronous>, transform_indices = @transform_3, window_bounds = array<i64: 8, 1>}, {transform_indices = @transform_4, window_bounds = array<i64: 2, 8, 128>}]} {
    %c0_i32 = arith.constant 0 : i32
    %0 = arith.cmpi eq, %arg1, %c0_i32 : i32
    %c0_i32_0 = arith.constant 0 : i32
    %1 = arith.cmpi eq, %arg2, %c0_i32_0 : i32
    %2 = arith.andi %0, %1 : i1
    %c0_i32_1 = arith.constant 0 : i32
    %3 = arith.cmpi eq, %arg0, %c0_i32_1 : i32
    %4 = arith.andi %3, %2 : i1
    %5 = arith.extui %4 : i1 to i32
    %c0_i32_2 = arith.constant 0 : i32
    %6 = arith.cmpi ne, %5, %c0_i32_2 : i32
    scf.if %6 {
      %cst = arith.constant 0.000000e+00 : f32
      %18 = vector.broadcast %cst : f32 to vector<8x1xf32>
      %c0_9 = arith.constant 0 : index
      %c0_10 = arith.constant 0 : index
      %19 = vector.load %arg8[%c0_9, %c0_10] : memref<8x1xf32, #tpu.memory_space<vmem>>, vector<8x1xf32>
      tpu.vector_store %arg8[%c0_9, %c0_10], %18 {strides = array<i32>} : memref<8x1xf32, #tpu.memory_space<vmem>>, vector<8x1xf32>,
      %cst_11 = arith.constant 0.000000e+00 : f32
      %20 = vector.broadcast %cst_11 : f32 to vector<8x1xf32>
      %c0_12 = arith.constant 0 : index
      %c0_13 = arith.constant 0 : index
      %21 = vector.load %arg9[%c0_12, %c0_13] : memref<8x1xf32, #tpu.memory_space<vmem>>, vector<8x1xf32>
      tpu.vector_store %arg9[%c0_12, %c0_13], %20 {strides = array<i32>} : memref<8x1xf32, #tpu.memory_space<vmem>>, vector<8x1xf32>,
    } else {
    }
    %c1_i32 = arith.constant 1 : i32
    %7 = arith.cmpi eq, %arg0, %c1_i32 : i32
    %8 = arith.andi %7, %2 : i1
    %9 = arith.extui %8 : i1 to i32
    %c0_i32_3 = arith.constant 0 : i32
    %10 = arith.cmpi ne, %9, %c0_i32_3 : i32
    scf.if %10 {
      %c0_9 = arith.constant 0 : index
      %c0_10 = arith.constant 0 : index
      %18 = vector.load %arg8[%c0_9, %c0_10] : memref<8x1xf32, #tpu.memory_space<vmem>>, vector<8x1xf32>
      %cst = arith.constant 7.812500e-03 : f32
      %19 = vector.broadcast %cst : f32 to vector<8x1xf32>
      %20 = arith.mulf %18, %19 : vector<8x1xf32>
      %c0_11 = arith.constant 0 : index
      %c0_12 = arith.constant 0 : index
      %21 = vector.load %arg9[%c0_11, %c0_12] : memref<8x1xf32, #tpu.memory_space<vmem>>, vector<8x1xf32>
      %cst_13 = arith.constant 7.812500e-03 : f32
      %22 = vector.broadcast %cst_13 : f32 to vector<8x1xf32>
      %23 = arith.mulf %21, %22 : vector<8x1xf32>
      %24 = arith.mulf %20, %20 : vector<8x1xf32>
      %25 = arith.subf %23, %24 : vector<8x1xf32>
      %c0_14 = arith.constant 0 : index
      %c0_15 = arith.constant 0 : index
      %26 = vector.load %arg5[%c0_14, %c0_15] : memref<8x1xf32, #tpu.memory_space<vmem>>, vector<8x1xf32>
      %cst_16 = arith.constant 9.99999974E-6 : f32
      %27 = vector.broadcast %cst_16 : f32 to vector<8x1xf32>
      %28 = arith.addf %25, %27 : vector<8x1xf32>
      %29 = math.rsqrt %28 : vector<8x1xf32>
      %30 = arith.mulf %26, %29 : vector<8x1xf32>
      %c0_17 = arith.constant 0 : index
      %c0_18 = arith.constant 0 : index
      %31 = vector.load %arg10[%c0_17, %c0_18] : memref<8x1xf32, #tpu.memory_space<vmem>>, vector<8x1xf32>
      tpu.vector_store %arg10[%c0_17, %c0_18], %30 {strides = array<i32>} : memref<8x1xf32, #tpu.memory_space<vmem>>, vector<8x1xf32>,
      %c0_19 = arith.constant 0 : index
      %c0_20 = arith.constant 0 : index
      %32 = vector.load %arg6[%c0_19, %c0_20] : memref<8x1xf32, #tpu.memory_space<vmem>>, vector<8x1xf32>
      %33 = arith.mulf %20, %30 : vector<8x1xf32>
      %34 = arith.subf %32, %33 : vector<8x1xf32>
      %c0_21 = arith.constant 0 : index
      %c0_22 = arith.constant 0 : index
      %35 = vector.load %arg11[%c0_21, %c0_22] : memref<8x1xf32, #tpu.memory_space<vmem>>, vector<8x1xf32>
      tpu.vector_store %arg11[%c0_21, %c0_22], %34 {strides = array<i32>} : memref<8x1xf32, #tpu.memory_space<vmem>>, vector<8x1xf32>,
    } else {
    }
    %c0 = arith.constant 0 : index
    %c0_4 = arith.constant 0 : index
    %11 = vector.load %arg4[%c0, %c0_4] : memref<8x4xbf16, #tpu.memory_space<vmem>>, vector<8x4xbf16>
    %c0_i32_5 = arith.constant 0 : i32
    %12 = arith.cmpi eq, %arg0, %c0_i32_5 : i32
    %13 = arith.extui %12 : i1 to i32
    %c0_i32_6 = arith.constant 0 : i32
    %14 = arith.cmpi ne, %13, %c0_i32_6 : i32
    scf.if %14 {
      %c0_i32_9 = arith.constant 0 : i32
      %c2_i32 = arith.constant 2 : i32
      %18 = arith.addi %c0_i32_9, %c2_i32 : i32
      %c1_i32_10 = arith.constant 1 : i32
      scf.for %arg12 = %c0_i32_9 to %18 step %c1_i32_10  : i32 {
        %c1_i32_12 = arith.constant 1 : i32
        %19 = arith.muli %arg12, %c1_i32_12 : i32
        %c0_i32_13 = arith.constant 0 : i32
        %20 = arith.addi %c0_i32_13, %19 : i32
        %21 = arith.index_cast %20 : i32 to index
        %c0_14 = arith.constant 0 : index
        %c0_15 = arith.constant 0 : index
        %22 = vector.load %arg3[%21, %c0_14, %c0_15] : memref<2x4x128xbf16, #tpu.memory_space<vmem>>, vector<1x4x128xbf16>
        %23 = vector.shape_cast %22 : vector<1x4x128xbf16> to vector<4x128xbf16>
        %cst = arith.constant dense<0.000000e+00> : vector<8x128xf32>
        %24 = tpu.matmul %11, %23, %cst {dimension_numbers = #tpu.dot_dimension_numbers<[1], [0], [0], [1], [0, 0, 1, 1], [], []>} : vector<8x4xbf16>, vector<4x128xbf16>, vector<8x128xf32> -> vector<8x128xf32>
        %c0_16 = arith.constant 0 : index
        %c0_17 = arith.constant 0 : index
        %25 = vector.load %arg8[%c0_16, %c0_17] : memref<8x1xf32, #tpu.memory_space<vmem>>, vector<8x1xf32>
        %cst_18 = arith.constant dense<0.000000e+00> : vector<8xf32>
        %26 = vector.multi_reduction <add>, %24, %cst_18 [1] : vector<8x128xf32> to vector<8xf32>
        %27 = vector.shape_cast %26 : vector<8xf32> to vector<8x1xf32>
        %28 = arith.addf %25, %27 : vector<8x1xf32>
        %c0_19 = arith.constant 0 : index
        %c0_20 = arith.constant 0 : index
        %29 = vector.load %arg8[%c0_19, %c0_20] : memref<8x1xf32, #tpu.memory_space<vmem>>, vector<8x1xf32>
        tpu.vector_store %arg8[%c0_19, %c0_20], %28 {strides = array<i32>} : memref<8x1xf32, #tpu.memory_space<vmem>>, vector<8x1xf32>,
        %c0_21 = arith.constant 0 : index
        %c0_22 = arith.constant 0 : index
        %30 = vector.load %arg9[%c0_21, %c0_22] : memref<8x1xf32, #tpu.memory_space<vmem>>, vector<8x1xf32>
        %31 = arith.mulf %24, %24 : vector<8x128xf32>
        %cst_23 = arith.constant dense<0.000000e+00> : vector<8xf32>
        %32 = vector.multi_reduction <add>, %31, %cst_23 [1] : vector<8x128xf32> to vector<8xf32>
        %33 = vector.shape_cast %32 : vector<8xf32> to vector<8x1xf32>
        %34 = arith.addf %30, %33 : vector<8x1xf32>
        %c0_24 = arith.constant 0 : index
        %c0_25 = arith.constant 0 : index
        %35 = vector.load %arg9[%c0_24, %c0_25] : memref<8x1xf32, #tpu.memory_space<vmem>>, vector<8x1xf32>
        tpu.vector_store %arg9[%c0_24, %c0_25], %34 {strides = array<i32>} : memref<8x1xf32, #tpu.memory_space<vmem>>, vector<8x1xf32>,
      }
      %c2_i32_11 = arith.constant 2 : i32
    } else {
    }
    %c1_i32_7 = arith.constant 1 : i32
    %15 = arith.cmpi eq, %arg0, %c1_i32_7 : i32
    %16 = arith.extui %15 : i1 to i32
    %c0_i32_8 = arith.constant 0 : i32
    %17 = arith.cmpi ne, %16, %c0_i32_8 : i32
    scf.if %17 {
      %c0_9 = arith.constant 0 : index
      %c0_10 = arith.constant 0 : index
      %18 = vector.load %arg10[%c0_9, %c0_10] : memref<8x1xf32, #tpu.memory_space<vmem>>, vector<8x1xf32>
      %c0_11 = arith.constant 0 : index
      %c0_12 = arith.constant 0 : index
      %19 = vector.load %arg11[%c0_11, %c0_12] : memref<8x1xf32, #tpu.memory_space<vmem>>, vector<8x1xf32>
      %c0_i32_13 = arith.constant 0 : i32
      %c2_i32 = arith.constant 2 : i32
      %20 = arith.addi %c0_i32_13, %c2_i32 : i32
      %c1_i32_14 = arith.constant 1 : i32
      scf.for %arg12 = %c0_i32_13 to %20 step %c1_i32_14  : i32 {
        %c1_i32_16 = arith.constant 1 : i32
        %21 = arith.muli %arg12, %c1_i32_16 : i32
        %c0_i32_17 = arith.constant 0 : i32
        %22 = arith.addi %c0_i32_17, %21 : i32
        %23 = arith.index_cast %22 : i32 to index
        %c0_18 = arith.constant 0 : index
        %c0_19 = arith.constant 0 : index
        %24 = vector.load %arg3[%23, %c0_18, %c0_19] : memref<2x4x128xbf16, #tpu.memory_space<vmem>>, vector<1x4x128xbf16>
        %25 = vector.shape_cast %24 : vector<1x4x128xbf16> to vector<4x128xbf16>
        %cst = arith.constant dense<0.000000e+00> : vector<8x128xf32>
        %26 = tpu.matmul %11, %25, %cst {dimension_numbers = #tpu.dot_dimension_numbers<[1], [0], [0], [1], [0, 0, 1, 1], [], []>} : vector<8x4xbf16>, vector<4x128xbf16>, vector<8x128xf32> -> vector<8x128xf32>
        %27 = vector.broadcast %18 : vector<8x1xf32> to vector<8x128xf32>
        %28 = arith.mulf %26, %27 : vector<8x128xf32>
        %29 = vector.broadcast %19 : vector<8x1xf32> to vector<8x128xf32>
        %30 = arith.addf %28, %29 : vector<8x128xf32>
        %31 = arith.index_cast %22 : i32 to index
        %c0_20 = arith.constant 0 : index
        %c0_21 = arith.constant 0 : index
        %32 = vector.load %arg7[%31, %c0_20, %c0_21] : memref<2x8x128xf32, #tpu.memory_space<vmem>>, vector<1x8x128xf32>
        %33 = vector.shape_cast %32 : vector<1x8x128xf32> to vector<8x128xf32>
        %34 = vector.shape_cast %30 : vector<8x128xf32> to vector<1x8x128xf32>
        tpu.vector_store %arg7[%31, %c0_20, %c0_21], %34 {strides = array<i32>} : memref<2x8x128xf32, #tpu.memory_space<vmem>>, vector<1x8x128xf32>,
      }
      %c2_i32_15 = arith.constant 2 : i32
    } else {
    }
    return
  }
  func.func @transform_0(%arg0: i32, %arg1: i32, %arg2: i32) -> (i32, i32, i32) {
    %c0_i32 = arith.constant 0 : i32
    %c0_i32_0 = arith.constant 0 : i32
    return %arg1, %c0_i32, %arg2 : i32, i32, i32
  }
  func.func @transform_1(%arg0: i32, %arg1: i32, %arg2: i32) -> (i32, i32) {
    %c0_i32 = arith.constant 0 : i32
    %c0_i32_0 = arith.constant 0 : i32
    %c0_i32_1 = arith.constant 0 : i32
    return %c0_i32, %c0_i32_0 : i32, i32
  }
  func.func @transform_2(%arg0: i32, %arg1: i32, %arg2: i32) -> (i32, i32) {
    %c0_i32 = arith.constant 0 : i32
    %c0_i32_0 = arith.constant 0 : i32
    %c0_i32_1 = arith.constant 0 : i32
    return %c0_i32, %c0_i32_0 : i32, i32
  }
  func.func @transform_3(%arg0: i32, %arg1: i32, %arg2: i32) -> (i32, i32) {
    %c0_i32 = arith.constant 0 : i32
    %c0_i32_0 = arith.constant 0 : i32
    %c0_i32_1 = arith.constant 0 : i32
    return %c0_i32, %c0_i32_0 : i32, i32
  }
  func.func @transform_4(%arg0: i32, %arg1: i32, %arg2: i32) -> (i32, i32, i32) {
    %0 = arith.muli %arg1, %arg0 : i32
    %1 = arith.muli %arg2, %arg0 : i32
    %c0_i32 = arith.constant 0 : i32
    %c0_i32_0 = arith.constant 0 : i32
    return %0, %c0_i32, %1 : i32, i32, i32
  }
}

</mosaic_0001>

<llo_original>
// kernel: tpu_custom_call.1
$region0: #{tpu_custom_call.1}
  #allocation0 [shape = 'u32[]', space=smem, size = 0x4, offset = 0x4, fixed_abs, tag = 'smem constant byte address 0x4 - core index']
  #allocation1 [shape = 'u32[144,128]{1,0:T(1,128)}', space=vmem, size = 0x12000, scoped, tag = 'internal scratch']
  #allocation2 [shape = 'f32[8,1]{1,0:T(8,128)}', space=vmem, size = 0x1000, scoped, tag = 'scratch operand']
  #allocation3 [shape = 'f32[8,1]{1,0:T(8,128)}', space=vmem, size = 0x1000, scoped, tag = 'scratch operand']
  #allocation4 [shape = 'f32[8,1]{1,0:T(8,128)}', space=vmem, size = 0x1000, scoped, tag = 'scratch operand']
  #allocation5 [shape = 'f32[8,1]{1,0:T(8,128)}', space=vmem, size = 0x1000, scoped, tag = 'scratch operand']
  %s0 = inlined_call_operand.vmem [shape: bf16[2,4,128], index: 0, kind: input, shape index: {}]
  %s1 = inlined_call_operand.vmem [shape: bf16[8,4], index: 1, kind: input, shape index: {}]
  %s2 = inlined_call_operand.vmem [shape: f32[8,1], index: 2, kind: input, shape index: {}]
  %s3 = inlined_call_operand.vmem [shape: f32[8,1], index: 3, kind: input, shape index: {}]
  %s4 = inlined_call_operand.hbm [shape: f32[2,8,128], index: 4, kind: output, shape index: {}]
  %s5 = sld [smem:[#allocation0]]
  $region79: #{tpu_custom_call.1} parent=0
    _
  %s7 = ssub.s32 1, %s5
  %s8 = scalar_select 0, %s7, %s5
  $region1: #{tpu_custom_call.1} parent=0
    #allocation6 [shape = 'u8[16384]{0}', space=vmem, size = 0x4000, scoped, tag = 'output window, operand 0']
    #allocation7 [shape = 's32[2]{0}', space=sflag, size = 0x8, scoped, tag = 'scoped memory for tpu_custom_call.1']
    %9 = vsyncpa [#allocation7], 0
    %s10 = scalar_lea.sflag [#allocation7], 1
    %11 = vsyncpa %s10, 0
    loop: start=0, step=1, limit=4
    $region2: #{tpu_custom_call.1} parent=1 // loop_pre_header
      _
    $region3: #{tpu_custom_call.1} parent=1 // loop_header
      %s13 = sphi 0, %s17
      %p14 = scmp.ge.s32.totalorder %s13, 4
      %s20 = sphi 0, %s39
      %s21 = sphi 0, %s35
      %s22 = sphi 0, %s31
      %s23 = sphi 0, %s20
      %s24 = sphi 0, %s21
      %s25 = sphi 0, %s22
      %s26 = sphi 0, %s23
      %s27 = sphi 0, %s24
      %s28 = sphi 0, %s25
      %s44 = sphi 0, %s46
      %s47 = sphi 0, %s44
      %s48 = sphi 0, %s47
      %s64 = sphi 0, %s48
      %s68 = sphi 0, %s68
      %s70 = sphi 0, %s68
      %s71 = sphi 0, %s70
      %s85 = sphi 0, %s71
      %s89 = sphi 0, %s89
      %s91 = sphi 0, %s89
      %s92 = sphi 0, %s91
      %s106 = sphi 0, %s92
      %s110 = sphi 0, %s110
      %s112 = sphi 0, %s110
      %s113 = sphi 0, %s112
      %s127 = sphi 0, %s113
      %s139 = sphi 0, %s141
      %s142 = sphi 0, %s139
      %s143 = sphi 0, %s142
      %s159 = sphi 0, %s143
    $region4: #{tpu_custom_call.1} parent=1 // loop_header_branch
      %16 = sbr.rel (%p14) target = $region8
    $region5: #{tpu_custom_call.1} parent=1 // loop_body
      %s18 = ssub.s32 %s13, 1
      %s19 = ssub.s32 %s13, 2
      %s29 = sadd.s32 1, %s22
      %p30 = scmp.ge.s32.totalorder %s29, 1
      %s31 = scalar_select %p30, 0, %s29
      %s32 = sadd.s32 1, %s21
      %s33 = scalar_select %p30, %s32, %s21
      %p34 = scmp.ge.s32.totalorder %s33, 1
      %s35 = scalar_select %p34, 0, %s33
      %s36 = sadd.s32 1, %s20
      %s37 = scalar_select %p34, %s36, %s20
      %p38 = scmp.ge.s32.totalorder %s37, 2
      %s39 = scalar_select %p38, 0, %s37
      %s40 = ssub.s32 %s21, %s35
      %s41 = ssub.s32 %s22, %s31
      %s42 = sor.u32 %s40, %s41
      %p43 = scmp.eq.s32.totalorder %s42, 0
      %s45 = sadd.s32 %s44, 1
      %s46 = scalar_select %p43, %s44, %s45
      %p49 = pneg %p43
      %p50 = scmp.eq.s32.totalorder %s13, 1
      %p51 = por %p49, %p50
      %p52 = scmp.ne.s32.totalorder %s44, %s47
      %p53 = scmp.eq.s32.totalorder %s13, 0
      %p54 = por %p52, %p53
      %p55 = scmp.ne.s32.totalorder %s44, %s47
      %p56 = scmp.eq.s32.totalorder %s18, 1
      %p57 = por %p55, %p56
      %p58 = scmp.ne.s32.totalorder %s47, %s48
      %p59 = scmp.eq.s32.totalorder %s18, 0
      %p60 = por %p58, %p59
      %p61 = scmp.ne.s32.totalorder %s47, %s48
      %p62 = scmp.eq.s32.totalorder %s19, 1
      %p63 = por %p61, %p62
      %p65 = scmp.ne.s32.totalorder %s48, %s64
      %p66 = scmp.eq.s32.totalorder %s19, 0
      %p67 = por %p65, %p66
      %s69 = sadd.s32 %s68, 1
      %p72 = scmp.eq.s32.totalorder %s13, 1
      %p73 = scmp.ne.s32.totalorder %s68, %s70
      %p74 = scmp.eq.s32.totalorder %s13, 0
      %p75 = por %p73, %p74
      %p76 = scmp.ne.s32.totalorder %s68, %s70
      %p77 = scmp.eq.s32.totalorder %s18, 1
      %p78 = por %p76, %p77
      %p79 = scmp.ne.s32.totalorder %s70, %s71
      %p80 = scmp.eq.s32.totalorder %s18, 0
      %p81 = por %p79, %p80
      %p82 = scmp.ne.s32.totalorder %s70, %s71
      %p83 = scmp.eq.s32.totalorder %s19, 1
      %p84 = por %p82, %p83
      %p86 = scmp.ne.s32.totalorder %s71, %s85
      %p87 = scmp.eq.s32.totalorder %s19, 0
      %p88 = por %p86, %p87
      %s90 = sadd.s32 %s89, 1
      %p93 = scmp.eq.s32.totalorder %s13, 1
      %p94 = scmp.ne.s32.totalorder %s89, %s91
      %p95 = scmp.eq.s32.totalorder %s13, 0
      %p96 = por %p94, %p95
      %p97 = scmp.ne.s32.totalorder %s89, %s91
      %p98 = scmp.eq.s32.totalorder %s18, 1
      %p99 = por %p97, %p98
      %p100 = scmp.ne.s32.totalorder %s91, %s92
      %p101 = scmp.eq.s32.totalorder %s18, 0
      %p102 = por %p100, %p101
      %p103 = scmp.ne.s32.totalorder %s91, %s92
      %p104 = scmp.eq.s32.totalorder %s19, 1
      %p105 = por %p103, %p104
      %p107 = scmp.ne.s32.totalorder %s92, %s106
      %p108 = scmp.eq.s32.totalorder %s19, 0
      %p109 = por %p107, %p108
      %s111 = sadd.s32 %s110, 1
      %p114 = scmp.eq.s32.totalorder %s13, 1
      %p115 = scmp.ne.s32.totalorder %s110, %s112
      %p116 = scmp.eq.s32.totalorder %s13, 0
      %p117 = por %p115, %p116
      %p118 = scmp.ne.s32.totalorder %s110, %s112
      %p119 = scmp.eq.s32.totalorder %s18, 1
      %p120 = por %p118, %p119
      %p121 = scmp.ne.s32.totalorder %s112, %s113
      %p122 = scmp.eq.s32.totalorder %s18, 0
      %p123 = por %p121, %p122
      %p124 = scmp.ne.s32.totalorder %s112, %s113
      %p125 = scmp.eq.s32.totalorder %s19, 1
      %p126 = por %p124, %p125
      %p128 = scmp.ne.s32.totalorder %s113, %s127
      %p129 = scmp.eq.s32.totalorder %s19, 0
      %p130 = por %p128, %p129
      %s131 = smul.u32 %s21, %s20
      %s132 = smul.u32 %s22, %s20
      %s133 = smul.u32 %s35, %s39
      %s134 = smul.u32 %s31, %s39
      %s135 = ssub.s32 %s131, %s133
      %s136 = ssub.s32 %s132, %s134
      %s137 = sor.u32 %s135, %s136
      %p138 = scmp.eq.s32.totalorder %s137, 0
      %s140 = sadd.s32 %s139, 1
      %s141 = scalar_select %p138, %s139, %s140
      %p144 = pneg %p138
      %p145 = scmp.eq.s32.totalorder %s13, 1
      %p146 = por %p144, %p145
      %p147 = scmp.ne.s32.totalorder %s139, %s142
      %p148 = scmp.eq.s32.totalorder %s13, 0
      %p149 = por %p147, %p148
      %p150 = scmp.ne.s32.totalorder %s139, %s142
      %p151 = scmp.eq.s32.totalorder %s18, 1
      %p152 = por %p150, %p151
      %p153 = scmp.ne.s32.totalorder %s142, %s143
      %p154 = scmp.eq.s32.totalorder %s18, 0
      %p155 = por %p153, %p154
      %p156 = scmp.ne.s32.totalorder %s142, %s143
      %p157 = scmp.eq.s32.totalorder %s19, 1
      %p158 = por %p156, %p157
      %p160 = scmp.ne.s32.totalorder %s143, %s159
      %p161 = scmp.eq.s32.totalorder %s19, 0
      %p162 = por %p160, %p161
      %p163 = scmp.le.s32.totalorder 1, %s13
      %p164 = scmp.lt.s32.totalorder %s13, 3
      %p165 = pnand %p163, %p164
      %p166 = pneg %p165
      // Predicated region
      $region9: #{tpu_custom_call.1} parent=5 // pred_check
        _
      $region10: #{tpu_custom_call.1} parent=5 // pred_check_branch
        %168 = sbr.rel (%p165) target = $region12
      $region11: #{tpu_custom_call.1} parent=5 // pred_region
        %s169 = ssub.s32 %s13, 1
        // Predicated region
        $region13: #{tpu_custom_call.1} parent=11 // pred_check
          %p170 = pneg %p60
        $region14: #{tpu_custom_call.1} parent=11 // pred_check_branch
          %172 = sbr.rel (%p170) target = $region16
        $region15: #{tpu_custom_call.1} parent=11 // pred_region
          %s173 = smul.u32 2, %s24
          %p174 = scmp.lt.s32.totalorder %s173, 1
          %s175 = scalar_select %p174, %s173, 1
          %p176 = scmp.lt.s32.totalorder %s25, 0
          %s177 = scalar_select %p176, %s25, 0
          %s178 = sadd.s32 %s177, %s175
          %s179 = smul.addr %s178, 2
          %s180 = scalar_lea.vmem %s0, %s179
          %s181 = smul.u32 2, %s24
        $region16: #{tpu_custom_call.1} parent=11 // pred_fallthru
          _
        // Predicated region
        $region17: #{tpu_custom_call.1} parent=11 // pred_check
          %p182 = pneg %p81
        $region18: #{tpu_custom_call.1} parent=11 // pred_check_branch
          %184 = sbr.rel (%p182) target = $region20
        $region19: #{tpu_custom_call.1} parent=11 // pred_region
          _
        $region20: #{tpu_custom_call.1} parent=11 // pred_fallthru
          _
        // Predicated region
        $region21: #{tpu_custom_call.1} parent=11 // pred_check
          %p185 = pneg %p102
        $region22: #{tpu_custom_call.1} parent=11 // pred_check_branch
          %187 = sbr.rel (%p185) target = $region24
        $region23: #{tpu_custom_call.1} parent=11 // pred_region
          _
        $region24: #{tpu_custom_call.1} parent=11 // pred_fallthru
          _
        // Predicated region
        $region25: #{tpu_custom_call.1} parent=11 // pred_check
          %p188 = pneg %p123
        $region26: #{tpu_custom_call.1} parent=11 // pred_check_branch
          %190 = sbr.rel (%p188) target = $region28
        $region27: #{tpu_custom_call.1} parent=11 // pred_region
          _
        $region28: #{tpu_custom_call.1} parent=11 // pred_fallthru
          _
      $region12: #{tpu_custom_call.1} parent=5 // pred_fallthru
        _
      %p191 = scmp.lt.s32.totalorder %s13, 2
      // Predicated region
      $region29: #{tpu_custom_call.1} parent=5 // pred_check
        %p192 = pneg %p191
      $region30: #{tpu_custom_call.1} parent=5 // pred_check_branch
        %194 = sbr.rel (%p192) target = $region32
      $region31: #{tpu_custom_call.1} parent=5 // pred_region
        _
      $region32: #{tpu_custom_call.1} parent=5 // pred_fallthru
        _
      %p195 = scmp.le.s32.totalorder 1, %s13
      %p196 = scmp.lt.s32.totalorder %s13, 3
      %p197 = pnand %p195, %p196
      %p198 = pneg %p197
      // Predicated region
      $region33: #{tpu_custom_call.1} parent=5 // pred_check
        _
      $region34: #{tpu_custom_call.1} parent=5 // pred_check_branch
        %200 = sbr.rel (%p197) target = $region36
      $region35: #{tpu_custom_call.1} parent=5 // pred_region
        %s201 = ssub.s32 %s13, 1
        %s202 = smul.u32 2, %s24
        %p203 = scmp.lt.s32.totalorder %s202, 1
        %s204 = scalar_select %p203, %s202, 1
        %p205 = scmp.lt.s32.totalorder %s25, 0
        %s206 = scalar_select %p205, %s25, 0
        %s207 = sadd.s32 %s206, %s204
        %s208 = smul.addr %s207, 2
        %s209 = scalar_lea.vmem %s0, %s208
        %p210 = pneg %p60
        %p211 = pneg %p57
        %p212 = pneg %p81
        %p213 = pneg %p78
        %p214 = pneg %p102
        %p215 = pneg %p99
        %p216 = pneg %p123
        %p217 = pneg %p120
        %p218 = pneg %p155
        %p219 = pneg %p152
        %s220 = sand.u32 %s142, 1
        %s221 = scalar_lea.sflag [#allocation7], %s220
        %s222 = sand.u32 %s142, 1
        %s223 = smul.addr %s222, 16
        %s224 = scalar_lea.vmem [#allocation6], %s223
        %s225 = smul.u32 2, %s24
        %p226 = scmp.lt.s32.totalorder %s225, 1
        %s227 = scalar_select %p226, %s225, 1
        %p228 = scmp.lt.s32.totalorder %s25, 0
        %s229 = scalar_select %p228, %s25, 0
        %s230 = sadd.s32 %s229, %s227
        %s231 = smul.addr %s230, 2
        %s232 = scalar_lea.vmem %s0, %s231
        %s233 = smul.u32 2, %s24
        %s234 = smul.u32 %s24, %s23
        %s235 = smul.u32 %s25, %s23
        %s236 = smul.u32 2, %s234
        %p238 = scmp.eq.s32.totalorder %s24, 0
        %p239 = scmp.eq.s32.totalorder %s25, 0
        %p240 = pnand %p238, %p239
        %p241 = pneg %p240
        %p242 = scmp.eq.s32.totalorder %s23, 0
        %p243 = pnand %p242, %p241
        %p244 = pneg %p243
        // Predicated region
        $region37: #{tpu_custom_call.1} parent=35 // pred_check
          _
        $region38: #{tpu_custom_call.1} parent=35 // pred_check_branch
          %246 = sbr.rel (%p243) target = $region40
        $region39: #{tpu_custom_call.1} parent=35 // pred_region
          %vm247 = vcmask 7168
          %248 = vst.msk [vmem:[#allocation2] sm:$0xff] %vm247, 0.0
          %249 = vst.msk [vmem:[#allocation3] sm:$0xff] %vm247, 0.0
        $region40: #{tpu_custom_call.1} parent=35 // pred_fallthru
          _
        %p250 = scmp.eq.s32.totalorder %s23, 1
        %p251 = pnand %p250, %p241
        %p252 = pneg %p251
        // Predicated region
        $region41: #{tpu_custom_call.1} parent=35 // pred_check
          _
        $region42: #{tpu_custom_call.1} parent=35 // pred_check_branch
          %254 = sbr.rel (%p251) target = $region44
        $region43: #{tpu_custom_call.1} parent=35 // pred_region
          %v255 = vld [vmem:[#allocation2] sm:$0xff]
          %v256 = vmul.f32 %v255, 0.0078125
          %v257 = vld [vmem:[#allocation3] sm:$0xff]
          %v258 = vmul.f32 %v257, 0.0078125
          %v259 = vmul.f32 %v256, %v256
          %v260 = vsub.f32 %v258, %v259
          %v261 = vld [vmem:[%s2] sm:$0xff]
          %v262 = vadd.f32 %v260, 1e-05
          %v263 = vrsqrt.pop %v262
          %v264 = vmul.f32 %v261, %v263
          %vm265 = vcmask 7168
          %266 = vst.msk [vmem:[#allocation4] sm:$0xff] %vm265, %v264
          %v267 = vld [vmem:[%s3] sm:$0xff]
          %v268 = vmul.f32 %v256, %v264
          %v269 = vsub.f32 %v267, %v268
          %270 = vst.msk [vmem:[#allocation5] sm:$0xff] %vm265, %v269
        $region44: #{tpu_custom_call.1} parent=35 // pred_fallthru
          _
        %v271 = vld [vmem:[%s1] sm:$0xf]
        // Predicated region
        $region45: #{tpu_custom_call.1} parent=35 // pred_check
          %p272 = pneg %p242
        $region46: #{tpu_custom_call.1} parent=35 // pred_check_branch
          %274 = sbr.rel (%p272) target = $region48
        $region47: #{tpu_custom_call.1} parent=35 // pred_region
          loop: start=0, step=1, limit=2
          $region49: #{tpu_custom_call.1} parent=47 // loop_pre_header
            _
          $region50: #{tpu_custom_call.1} parent=47 // loop_header
            %s276 = sphi 0, %s280
            %p277 = scmp.ge.s32.totalorder %s276, 2
          $region51: #{tpu_custom_call.1} parent=47 // loop_header_branch
            %279 = sbr.rel (%p277) target = $region55
          $region52: #{tpu_custom_call.1} parent=47 // loop_body
            %s281 = smul.addr %s276, 2
            %s282 = scalar_lea.vmem %s232, %s281
            %v283 = vld [vmem:[%s282] sm:$0x3]
            %vm284 = vcmask 31744
            %v286 = vsel %vm284, %v271, 0
            %vm288 = vcmask 1041408
            %v290 = vsel %vm288, %v283, 0
            %292 = vmatprep.subr.bf16.mxu0 0
            %293 = vmatpush1.bf16.msra.mxu0 0
            %294 = vmatprep.subr.bf16.mxu0 0
            %295 = vmatpush1.bf16.msra.mxu0 0
            %296 = vmatprep.subr.bf16.mxu0 0
            %297 = vmatpush1.bf16.msra.mxu0 0
            %298 = vmatprep.subr.bf16.mxu0 0
            %299 = vmatpush1.bf16.msra.mxu0 0
            %300 = vmatprep.subr.bf16.mxu0 0
            %301 = vmatpush1.bf16.msra.mxu0 0
            %302 = vmatprep.subr.bf16.mxu0 0
            %303 = vmatpush1.bf16.msra.mxu0 0
            %304 = vmatprep.subr.bf16.mxu0 0
            %305 = vmatpush1.bf16.msra.mxu0 0
            %306 = vmatprep.subr.bf16.mxu0 0
            %307 = vmatpush1.bf16.msra.mxu0 %v290
            %308 = vmatprep.subr.bf16.mxu0 0
            %309 = vmatpush2.bf16.msra.mxu0 0
            %310 = vmatprep.subr.bf16.mxu0 0
            %311 = vmatpush2.bf16.msra.mxu0 0
            %312 = vmatprep.subr.bf16.mxu0 0
            %313 = vmatpush2.bf16.msra.mxu0 0
            %314 = vmatprep.subr.bf16.mxu0 0
            %315 = vmatpush2.bf16.msra.mxu0 0
            %316 = vmatprep.subr.bf16.mxu0 0
            %317 = vmatpush2.bf16.msra.mxu0 0
            %318 = vmatprep.subr.bf16.mxu0 0
            %319 = vmatpush2.bf16.msra.mxu0 0
            %320 = vmatprep.subr.bf16.mxu0 0
            %321 = vmatpush2.bf16.msra.mxu0 0
            %322 = vmatprep.subr.bf16.mxu0 0
            %323 = vmatpush2.bf16.msra.mxu0 0
            %324 = vmatprep.mubr.bf16.mxu0 0
            %325 = vmatmul.mubr.bf16.gmra.mxu0 %v286
            %v326 = vpop.f32.mrf.mxu0
            %v327 = vadd.f32 0.0, %v326
            %v328 = vpop.f32.mrf.mxu0
            %v329 = vpop.f32.mrf.mxu0
            %v330 = vpop.f32.mrf.mxu0
            %331 = vdwg.mxu0
            %v332 = vld [vmem:[#allocation2] sm:$0xff]
            %333 = vadd.xlane.f32.xlu0 %v327
            %v334 = vpop.xlane.xlu0 %333
            %v335 = vadd.f32 %v332, %v334
            %vm336 = vcmask 7168
            %337 = vst.msk [vmem:[#allocation2] sm:$0xff] %vm336, %v335
            %v338 = vld [vmem:[#allocation3] sm:$0xff]
            %v339 = vmul.f32 %v327, %v327
            %340 = vadd.xlane.f32.xlu0 %v339
            %v341 = vpop.xlane.xlu0 %340
            %v342 = vadd.f32 %v338, %v341
            %343 = vst.msk [vmem:[#allocation3] sm:$0xff] %vm336, %v342
          $region53: #{tpu_custom_call.1} parent=47 // loop_footer
            %s280 = sadd.s32 1, %s276
          $region54: #{tpu_custom_call.1} parent=47 // loop_footer_branch
            %275 = sbr.rel target = $region50
          $region55: #{tpu_custom_call.1} parent=47 // loop_exit
            _
        $region48: #{tpu_custom_call.1} parent=35 // pred_fallthru
          _
        // Predicated region
        $region56: #{tpu_custom_call.1} parent=35 // pred_check
          %p344 = pneg %p250
        $region57: #{tpu_custom_call.1} parent=35 // pred_check_branch
          %346 = sbr.rel (%p344) target = $region59
        $region58: #{tpu_custom_call.1} parent=35 // pred_region
          %v347 = vld [vmem:[#allocation4] sm:$0xff]
          %v348 = vld [vmem:[#allocation5] sm:$0xff]
          loop: start=0, step=1, limit=2
          $region60: #{tpu_custom_call.1} parent=58 // loop_pre_header
            _
          $region61: #{tpu_custom_call.1} parent=58 // loop_header
            %s350 = sphi 0, %s354
            %p351 = scmp.ge.s32.totalorder %s350, 2
          $region62: #{tpu_custom_call.1} parent=58 // loop_header_branch
            %353 = sbr.rel (%p351) target = $region66
          $region63: #{tpu_custom_call.1} parent=58 // loop_body
            %s355 = smul.addr %s350, 2
            %s356 = scalar_lea.vmem %s232, %s355
            %v357 = vld [vmem:[%s356] sm:$0x3]
            %vm358 = vcmask 31744
            %v360 = vsel %vm358, %v271, 0
            %vm362 = vcmask 1041408
            %v364 = vsel %vm362, %v357, 0
            %366 = vmatprep.subr.bf16.mxu0 0
            %367 = vmatpush1.bf16.msra.mxu0 0
            %368 = vmatprep.subr.bf16.mxu0 0
            %369 = vmatpush1.bf16.msra.mxu0 0
            %370 = vmatprep.subr.bf16.mxu0 0
            %371 = vmatpush1.bf16.msra.mxu0 0
            %372 = vmatprep.subr.bf16.mxu0 0
            %373 = vmatpush1.bf16.msra.mxu0 0
            %374 = vmatprep.subr.bf16.mxu0 0
            %375 = vmatpush1.bf16.msra.mxu0 0
            %376 = vmatprep.subr.bf16.mxu0 0
            %377 = vmatpush1.bf16.msra.mxu0 0
            %378 = vmatprep.subr.bf16.mxu0 0
            %379 = vmatpush1.bf16.msra.mxu0 0
            %380 = vmatprep.subr.bf16.mxu0 0
            %381 = vmatpush1.bf16.msra.mxu0 %v364
            %382 = vmatprep.subr.bf16.mxu0 0
            %383 = vmatpush2.bf16.msra.mxu0 0
            %384 = vmatprep.subr.bf16.mxu0 0
            %385 = vmatpush2.bf16.msra.mxu0 0
            %386 = vmatprep.subr.bf16.mxu0 0
            %387 = vmatpush2.bf16.msra.mxu0 0
            %388 = vmatprep.subr.bf16.mxu0 0
            %389 = vmatpush2.bf16.msra.mxu0 0
            %390 = vmatprep.subr.bf16.mxu0 0
            %391 = vmatpush2.bf16.msra.mxu0 0
            %392 = vmatprep.subr.bf16.mxu0 0
            %393 = vmatpush2.bf16.msra.mxu0 0
            %394 = vmatprep.subr.bf16.mxu0 0
            %395 = vmatpush2.bf16.msra.mxu0 0
            %396 = vmatprep.subr.bf16.mxu0 0
            %397 = vmatpush2.bf16.msra.mxu0 0
            %398 = vmatprep.mubr.bf16.mxu0 0
            %399 = vmatmul.mubr.bf16.gmra.mxu0 %v360
            %v400 = vpop.f32.mrf.mxu0
            %v401 = vadd.f32 0.0, %v400
            %v402 = vpop.f32.mrf.mxu0
            %v403 = vpop.f32.mrf.mxu0
            %v404 = vpop.f32.mrf.mxu0
            %405 = vdwg.mxu0
            %407 = vset.pattern.permute.xlu0 0
            %408 = vperm.xlu0 %407, %v347
            %v409 = vpop.permute.xlu0 %408
            %v411 = vmul.f32 %v401, %v409
            %413 = vset.pattern.permute.xlu0 0
            %414 = vperm.xlu0 %413, %v348
            %v415 = vpop.permute.xlu0 %414
            %v417 = vadd.f32 %v411, %v415
            %s418 = smul.u32 %s350, 8
            %s419 = scalar_lea.vmem %s224, %s418 [#allocation6]
            %420 = vst [vmem:[%s419] sm:$0xff] %v417
          $region64: #{tpu_custom_call.1} parent=58 // loop_footer
            %s354 = sadd.s32 1, %s350
          $region65: #{tpu_custom_call.1} parent=58 // loop_footer_branch
            %349 = sbr.rel target = $region61
          $region66: #{tpu_custom_call.1} parent=58 // loop_exit
            _
        $region59: #{tpu_custom_call.1} parent=35 // pred_fallthru
          _
        %s421 = sand.u32 %s142, 1
        %s422 = scalar_lea.sflag [#allocation7], %s421
        %s423 = sand.u32 %s142, 1
        %s424 = smul.addr %s423, 16
        %s425 = scalar_lea.vmem [#allocation6], %s424
        // Predicated region
        $region67: #{tpu_custom_call.1} parent=35 // pred_check
          %p426 = pneg %p152
        $region68: #{tpu_custom_call.1} parent=35 // pred_check_branch
          %428 = sbr.rel (%p426) target = $region70
        $region69: #{tpu_custom_call.1} parent=35 // pred_region
          %s429 = smul.u32 %s24, %s23
          %s430 = smul.u32 %s25, %s23
          %s431 = smul.u32 2, %s429
          %s433 = ssub.s32 256, 256
          %434 = vsyncadd %s422, %s433
          %s435 = sadd.s32 %s430, %s431
          %s436 = smul.addr %s435, 128
          %s437 = scalar_lea.hbm %s4, %s436
          %s438 = sshll.u32 %s425, 4
          %s439 = int_to_ptr.vmem [resolvable:$true] %s438
          %444 = dma.vmem_to_hbm [thread:$0]  %s439, 256, %s437, %s422, 128, 128, 8
        $region70: #{tpu_custom_call.1} parent=35 // pred_fallthru
          _
      $region36: #{tpu_custom_call.1} parent=5 // pred_fallthru
        _
      %p445 = scmp.le.s32.totalorder 2, %s13
      // Predicated region
      $region71: #{tpu_custom_call.1} parent=5 // pred_check
        %p446 = pneg %p445
      $region72: #{tpu_custom_call.1} parent=5 // pred_check_branch
        %448 = sbr.rel (%p446) target = $region74
      $region73: #{tpu_custom_call.1} parent=5 // pred_region
        %s449 = ssub.s32 %s13, 2
        // Predicated region
        $region75: #{tpu_custom_call.1} parent=73 // pred_check
          %p450 = pneg %p158
        $region76: #{tpu_custom_call.1} parent=73 // pred_check_branch
          %452 = sbr.rel (%p450) target = $region78
        $region77: #{tpu_custom_call.1} parent=73 // pred_region
          %s453 = sand.u32 %s143, 1
          %s454 = scalar_lea.sflag [#allocation7], %s453
          %s455 = sand.u32 %s143, 1
          %s456 = smul.addr %s455, 16
          %s457 = scalar_lea.vmem [#allocation6], %s456
          %458 = dma.done %s454, 256
        $region78: #{tpu_custom_call.1} parent=73 // pred_fallthru
          _
      $region74: #{tpu_custom_call.1} parent=5 // pred_fallthru
        _
    $region6: #{tpu_custom_call.1} parent=1 // loop_footer
      %s17 = sadd.s32 1, %s13
    $region7: #{tpu_custom_call.1} parent=1 // loop_footer_branch
      %12 = sbr.rel target = $region3
    $region8: #{tpu_custom_call.1} parent=1 // loop_exit
      _
    %459 = vsyncpa [#allocation7], 1
    %s460 = scalar_lea.sflag [#allocation7], 1
    %461 = vsyncpa %s460, 1

</llo_original>
